<compile_context>
chip_gen: v7x
topology: tpu7x:2x2x1
jax: 0.10.0
libtpu: 0.0.40
codegen_flags: <defaults>
</compile_context>

<pallas_src>
import math

import jax
import jax.numpy as jnp
from jax.experimental import pallas as pl
from jax.experimental.pallas import tpu as pltpu

_LANE = 128
# Combined (x block + out block) bytes per grid step.  ~16 MiB combined keeps the
# fixed per-step cost (~0.35 us) under ~2% even on v7x, and double-buffered it fits
# every generation's scoped-VMEM ceiling chosen below.
_TARGET_COMBINED_BLOCK_BYTES = 16 << 20
_HEADROOM_BYTES = 4 << 20
# Below this many elements, XLA's fused elementwise add is already at roofline and
# kernel dispatch/grid setup would dominate.
_XLA_FAST_PATH_ELEMENTS = 1 << 20


def _bias_kernel(x_ref, b_ref, o_ref):
    # (tile_n, tile_d) x-tile + (1, tile_d) bias row-broadcast. The add promotes
    # (e.g. bf16 x + f32 bias -> f32) exactly like `x + bias[None, :]`; the cast
    # handles an optional narrower out_dtype. All of this is free filler under the
    # HBM-bound DMA, so no VPU micro-optimization is attempted.
    o_ref[...] = (x_ref[...] + b_ref[...]).astype(o_ref.dtype)


def _vmem_cap_bytes() -> int:
    """Generation-aware scoped-VMEM ceiling for this kernel."""
    try:
        info = pltpu.get_tpu_info()
        cap = None
        for name in ("vmem_capacity_bytes", "vmem_bytes"):
            cap = getattr(info, name, None)
            if cap:
                break
        if cap:
            if cap >= (100 << 20):   # v5e / v6e: 128 MiB physical VMEM
                return 64 << 20
            return 44 << 20          # v7x: 64 MiB physical VMEM
    except Exception:
        pass
    return 32 << 20                  # conservative fallback (query unavailable)


def _sublane_multiple(*dtypes) -> int:
    # f32 -> 8, bf16/f16 -> 16, int8/fp8 -> 32 (sublane packing of the narrowest dtype).
    min_itemsize = min(jnp.dtype(dt).itemsize for dt in dtypes)
    return 32 // min_itemsize


def _choose_tiles(n, d, x_itemsize, o_itemsize, sublane, combined_budget):
    per_elem = x_itemsize + o_itemsize
    # Prefer full-row (contiguous-DMA) blocks; split the feature dim only when even
    # `sublane` full rows blow the per-step budget (very wide d).
    if d * sublane * per_elem <= combined_budget:
        tile_d = d
    else:
        tile_d = max(_LANE, (combined_budget // (sublane * per_elem)) // _LANE * _LANE)
        tile_d = min(tile_d, d)
    tile_n = max(sublane, combined_budget // max(1, tile_d * per_elem))
    if tile_n >= n:
        tile_n = n                                   # full first dim: always legal
    else:
        tile_n = max(sublane, (tile_n // sublane) * sublane)
    return tile_n, tile_d


def _bias_add_2d(x, bias2d, out_dtype, donate_x):
    n, d = x.shape
    x_itemsize = jnp.dtype(x.dtype).itemsize
    o_itemsize = jnp.dtype(out_dtype).itemsize
    b_itemsize = jnp.dtype(bias2d.dtype).itemsize
    sublane = _sublane_multiple(x.dtype, out_dtype)

    cap = _vmem_cap_bytes()
    # Per-step combined budget derived from the ceiling: 2x(double-buffer) of the
    # combined block + bias + headroom must stay under `cap`.
    budget = min(_TARGET_COMBINED_BLOCK_BYTES,
                 max(1 << 20, (cap - _HEADROOM_BYTES) // 2 - 2 * d * b_itemsize))
    tile_n, tile_d = _choose_tiles(n, d, x_itemsize, o_itemsize, sublane, budget)

    need = (2 * tile_n * tile_d * (x_itemsize + o_itemsize)
            + 2 * tile_d * b_itemsize + _HEADROOM_BYTES)
    vmem_limit = int(min(max(need, 16 << 20), cap))

    io_aliases = {0: 0} if (donate_x and jnp.dtype(x.dtype) == jnp.dtype(out_dtype)) else {}

    if tile_d == d:
        # Full-row contiguous blocks; single row-tile grid axis so megacore (v7x)
        # shards the large axis. Bias block stays VMEM-resident across all steps.
        grid = (pl.cdiv(n, tile_n),)
        in_specs = [
            pl.BlockSpec((tile_n, d), lambda i: (i, 0)),
            pl.BlockSpec((1, d), lambda i: (0, 0)),
        ]
        out_spec = pl.BlockSpec((tile_n, d), lambda i: (i, 0))
        dims = ("parallel",)
    else:
        # Very-wide-d fallback: rows (the large axis) lead so megacore shards them;
        # re-DMAing the tiny bias chunk each step is negligible.
        grid = (pl.cdiv(n, tile_n), pl.cdiv(d, tile_d))
        in_specs = [
            pl.BlockSpec((tile_n, tile_d), lambda i, j: (i, j)),
            pl.BlockSpec((1, tile_d), lambda i, j: (0, j)),
        ]
        out_spec = pl.BlockSpec((tile_n, tile_d), lambda i, j: (i, j))
        dims = ("parallel", "parallel")

    return pl.pallas_call(
        _bias_kernel,
        out_shape=jax.ShapeDtypeStruct((n, d), out_dtype),
        grid=grid,
        in_specs=in_specs,
        out_specs=out_spec,
        compiler_params=pltpu.CompilerParams(
            dimension_semantics=dims,
            vmem_limit_bytes=vmem_limit,
        ),
        input_output_aliases=io_aliases,
    )(x, bias2d)


def bias_forward(x, bias, *, out_dtype=None, donate_x=False,
                 min_pallas_elements=_XLA_FAST_PATH_ELEMENTS):
    """pykeen Bias forward: x + bias[None, :] for x of shape (n, d), bias of shape (d,)."""
    assert x.ndim == 2
    n, d = x.shape
    assert bias.shape == (d,)
    if out_dtype is None:
        out_dtype = jnp.result_type(x.dtype, bias.dtype)   # torch/jax promotion of x + bias
    out_dtype = jnp.dtype(out_dtype)

    # Tiny inputs: kernel dispatch would dominate; XLA's fused add is at roofline.
    if n * d < min_pallas_elements:
        return (x + bias[None, :]).astype(out_dtype)

    # Lane-dense fold for narrow feature dims: view (n, d) flat as (R, L) with
    # L = lcm(d, 128) so the kernel's last dim is a 128-lane multiple (full vst
    # instead of masked partial stores). Pad n up to the fold factor if needed
    # and slice the result back (exact reproduction of x + bias[None, :]).
    if d < _LANE:
        L = d * (_LANE // math.gcd(d, _LANE))          # lcm(d, 128), multiple of 128
        rows_per_flat = L // d
        n_pad = ((n + rows_per_flat - 1) // rows_per_flat) * rows_per_flat
        x_ld = x if n_pad == n else jnp.pad(x, ((0, n_pad - n), (0, 0)))
        x_ld = x_ld.reshape((n_pad * d) // L, L)
        bias_ld = jnp.tile(bias, L // d).reshape(1, L)  # feature = lane % d, row-invariant
        out = _bias_add_2d(x_ld, bias_ld, out_dtype, donate_x and n_pad == n)
        out = out.reshape(n_pad, d)
        return out if n_pad == n else out[:n]

    return _bias_add_2d(x, bias.reshape(1, d), out_dtype, donate_x)


if __name__ == "__main__":
    key = jax.random.PRNGKey(0)
    k1, k2, k3, k4, k5 = jax.random.split(key, 5)

    # Module: Bias(dim=d); reset_parameters() zero-inits the bias.
    # Small shapes consistent with the module; min_pallas_elements=0 forces the
    # Pallas path so the kernel itself is exercised at these sizes.
    n, d = 8, 32
    x = jax.random.normal(k1, (n, d), dtype=jnp.float32)
    bias_zero = jnp.zeros((d,), dtype=jnp.float32)          # matches nn.init.zeros_
    bias_nz = jnp.arange(d, dtype=jnp.float32) * 0.01       # exercise nonzero broadcast

    out_zero = jax.block_until_ready(bias_forward(x, bias_zero, min_pallas_elements=0))
    out_nz = jax.block_until_ready(bias_forward(x, bias_nz, min_pallas_elements=0))
    assert out_zero.shape == (n, d) and out_zero.dtype == x.dtype
    assert jnp.allclose(out_zero, x + bias_zero[None, :])
    assert jnp.allclose(out_nz, x + bias_nz[None, :])

    # Narrow-d with n NOT a multiple of the lane-dense fold factor (pad + slice path).
    x_r = jax.random.normal(k2, (10, d), dtype=jnp.float32)
    out_r = jax.block_until_ready(bias_forward(x_r, bias_nz, min_pallas_elements=0))
    assert out_r.shape == (10, d)
    assert jnp.allclose(out_r, x_r + bias_nz[None, :])

    # Mixed-dtype promotion parity (bf16 x + f32 bias -> f32) and bf16 out override.
    x_bf16 = x.astype(jnp.bfloat16)
    out_mixed = jax.block_until_ready(bias_forward(x_bf16, bias_nz, min_pallas_elements=0))
    assert out_mixed.dtype == jnp.float32
    assert jnp.allclose(out_mixed, x_bf16 + bias_nz[None, :])
    out_bf16 = jax.block_until_ready(
        bias_forward(x_bf16, bias_nz, out_dtype=jnp.bfloat16, min_pallas_elements=0))
    assert out_bf16.dtype == jnp.bfloat16
    assert jnp.allclose(out_bf16, (x_bf16 + bias_nz[None, :]).astype(jnp.bfloat16))

    # Ragged-n, full-row contiguous block path (crosses the XLA fast-path threshold).
    n2, d2 = 4100, 256
    x2 = jax.random.normal(k3, (n2, d2), dtype=jnp.float32)
    b2 = jax.random.normal(k4, (d2,), dtype=jnp.float32)
    out2 = jax.block_until_ready(bias_forward(x2, b2))
    assert out2.shape == (n2, d2)
    assert jnp.allclose(out2, x2 + b2[None, :])

    # Multi-step row-tiled grid with a ragged edge block (pl.cdiv on rows).
    n3, d3 = 2500, 1024
    x3 = jax.random.normal(k5, (n3, d3), dtype=jnp.float32)
    b3 = jnp.linspace(-1.0, 1.0, d3, dtype=jnp.float32)
    out3 = jax.block_until_ready(bias_forward(x3, b3))
    assert out3.shape == (n3, d3)
    assert jnp.allclose(out3, x3 + b3[None, :])

    print("KERNEL_OK")
</pallas_src>

<mosaic_0001>
module attributes {stable_mosaic.version = 11 : i64} {
  func.func @_bias_kernel(%arg0: i32, %arg1: memref<2x128xf32, #tpu.memory_space<vmem>>, %arg2: memref<1x128xf32, #tpu.memory_space<vmem>>, %arg3: memref<2x128xf32, #tpu.memory_space<vmem>>) attributes {dimension_semantics = [#tpu.dimension_semantics<parallel>], iteration_bounds = array<i64: 1>, scalar_prefetch = 0 : i64, scratch_operands = 0 : i64, tpu.core_type = #tpu.core_type<tc>, window_params = [{transform_indices = @transform_0, window_bounds = array<i64: 2, 128>}, {pipeline_mode = #tpu.pipeline_mode<synchronous>, transform_indices = @transform_1, window_bounds = array<i64: 1, 128>}, {transform_indices = @transform_2, window_bounds = array<i64: 2, 128>}]} {
    %c0 = arith.constant 0 : index
    %c0_0 = arith.constant 0 : index
    %0 = vector.load %arg1[%c0, %c0_0] : memref<2x128xf32, #tpu.memory_space<vmem>>, vector<2x128xf32>
    %c0_1 = arith.constant 0 : index
    %c0_2 = arith.constant 0 : index
    %1 = vector.load %arg2[%c0_1, %c0_2] : memref<1x128xf32, #tpu.memory_space<vmem>>, vector<1x128xf32>
    %2 = vector.broadcast %1 : vector<1x128xf32> to vector<2x128xf32>
    %3 = arith.addf %0, %2 : vector<2x128xf32>
    %c0_3 = arith.constant 0 : index
    %c0_4 = arith.constant 0 : index
    %4 = vector.load %arg3[%c0_3, %c0_4] : memref<2x128xf32, #tpu.memory_space<vmem>>, vector<2x128xf32>
    tpu.vector_store %arg3[%c0_3, %c0_4], %3 {strides = array<i32>} : memref<2x128xf32, #tpu.memory_space<vmem>>, vector<2x128xf32>,
    return
  }
  func.func @transform_0(%arg0: i32) -> (i32, i32) {
    %c0_i32 = arith.constant 0 : i32
    %c0_i32_0 = arith.constant 0 : i32
    return %arg0, %c0_i32 : i32, i32
  }
  func.func @transform_1(%arg0: i32) -> (i32, i32) {
    %c0_i32 = arith.constant 0 : i32
    %c0_i32_0 = arith.constant 0 : i32
    %c0_i32_1 = arith.constant 0 : i32
    return %c0_i32, %c0_i32_0 : i32, i32
  }
  func.func @transform_2(%arg0: i32) -> (i32, i32) {
    %c0_i32 = arith.constant 0 : i32
    %c0_i32_0 = arith.constant 0 : i32
    return %arg0, %c0_i32 : i32, i32
  }
}

</mosaic_0001>

<llo_original>
// kernel: tpu_custom_call.1
$region0: #{tpu_custom_call.1}
  #allocation0 [shape = 'u32[]', space=smem, size = 0x4, offset = 0x4, fixed_abs, tag = 'smem constant byte address 0x4 - core index']
  #allocation1 [shape = 'u32[144,128]{1,0:T(1,128)}', space=vmem, size = 0x12000, scoped, tag = 'internal scratch']
  %s0 = inlined_call_operand.hbm [shape: f32[2,128], index: 0, kind: input, shape index: {}]
  %s1 = inlined_call_operand.vmem [shape: f32[1,128], index: 1, kind: input, shape index: {}]
  %s2 = inlined_call_operand.hbm [shape: f32[2,128], index: 2, kind: output, shape index: {}]
  %s3 = sld [smem:[#allocation0]]
  $region22: #{tpu_custom_call.1} parent=0
    _
  %s5 = ssub.s32 1, %s3
  %s6 = scalar_select 0, %s5, %s3
  $region1: #{tpu_custom_call.1} parent=0
    #allocation2 [shape = 'u8[1024]{0}', space=vmem, size = 0x400, scoped, tag = 'input window, operand 0, single buffered']
    #allocation3 [shape = 's32[1]{0}', space=sflag, size = 0x4, scoped, tag = 'scoped memory for tpu_custom_call.1']
    #allocation4 [shape = 's32[1]{0}', space=sflag, size = 0x4, scoped, tag = 'scoped memory for tpu_custom_call.1']
    #allocation5 [shape = 'u8[1024]{0}', space=vmem, size = 0x400, scoped, tag = 'output window, operand 0, single buffered']
    %7 = vsyncpa [#allocation3], 0
    %8 = vsyncpa [#allocation4], 0
    // Predicated region
    $region2: #{tpu_custom_call.1} parent=1 // pred_check
      _
    $region3: #{tpu_custom_call.1} parent=1 // pred_check_branch
      %10 = sbr.rel (0) target = $region5
    $region4: #{tpu_custom_call.1} parent=1 // pred_region
      %s12 = ssub.s32 32, 32
      %13 = vsyncadd [#allocation3], %s12
      %s15 = sshll.u32 [#allocation2], 4
      %s16 = int_to_ptr.vmem [resolvable:$true] %s15
      %18 = dma.hbm_to_vmem [thread:$0]  %s0, 32, %s16, [#allocation3]
    $region5: #{tpu_custom_call.1} parent=1 // pred_fallthru
      _
    // Predicated region
    $region6: #{tpu_custom_call.1} parent=1 // pred_check
      _
    $region7: #{tpu_custom_call.1} parent=1 // pred_check_branch
      %20 = sbr.rel (0) target = $region9
    $region8: #{tpu_custom_call.1} parent=1 // pred_region
      _
    $region9: #{tpu_custom_call.1} parent=1 // pred_fallthru
      _
    // Predicated region
    $region10: #{tpu_custom_call.1} parent=1 // pred_check
      _
    $region11: #{tpu_custom_call.1} parent=1 // pred_check_branch
      %22 = sbr.rel (0) target = $region13
    $region12: #{tpu_custom_call.1} parent=1 // pred_region
      %23 = dma.done [#allocation3], 32
    $region13: #{tpu_custom_call.1} parent=1 // pred_fallthru
      _
    %v24 = vld [vmem:[#allocation2] sm:$0x3]
    %v25 = vld [vmem:[%s1] sm:$0x1]
    %v27 = vlaneseq
    %v28 = vshrl.u32 %v27, 7
    %v29 = vsub.s32 0, %v28
    %v30 = vrot.slane %v25, %v29
    %v32 = vadd.f32 %v24, %v30
    %33 = vst [vmem:[#allocation5] sm:$0x3] %v32
    // Predicated region
    $region14: #{tpu_custom_call.1} parent=1 // pred_check
      _
    $region15: #{tpu_custom_call.1} parent=1 // pred_check_branch
      %35 = sbr.rel (0) target = $region17
    $region16: #{tpu_custom_call.1} parent=1 // pred_region
      %s37 = ssub.s32 32, 32
      %38 = vsyncadd [#allocation4], %s37
      %s40 = sshll.u32 [#allocation5], 4
      %s41 = int_to_ptr.vmem [resolvable:$true] %s40
      %43 = dma.vmem_to_hbm [thread:$0]  %s41, 32, %s2, [#allocation4]
    $region17: #{tpu_custom_call.1} parent=1 // pred_fallthru
      _
    // Predicated region
    $region18: #{tpu_custom_call.1} parent=1 // pred_check
      _
    $region19: #{tpu_custom_call.1} parent=1 // pred_check_branch
      %45 = sbr.rel (0) target = $region21
    $region20: #{tpu_custom_call.1} parent=1 // pred_region
      %46 = dma.done [#allocation4], 32
    $region21: #{tpu_custom_call.1} parent=1 // pred_fallthru
      _
    %47 = vsyncpa [#allocation3], 1
    %48 = vsyncpa [#allocation4], 1

</llo_original>
